<compile_context>
chip_gen: v5e
topology: v5e:2x2
jax: 0.10.0
libtpu: 0.0.40
codegen_flags: <defaults>
</compile_context>

<pallas_src>
import jax
import jax.numpy as jnp
from jax import lax
from jax.experimental import pallas as pl
from jax.experimental.pallas import tpu as pltpu

_K = 9          # 3x3 taps
_K_PAD = 16     # contraction dim padded to a sublane-friendly 16 (row 9 = bias row)


def _glimpse_kernel(w_ref, p_ref, o_ref):
    # w_ref: (C, K_PAD)              folded conv weights; column 9 carries the BN shift
    # p_ref: (B_TILE, K_PAD, Ho*Wo)  transposed im2col patches; row 9 = 1.0
    # o_ref: (B_TILE, C, Ho*Wo)      NCHW-ordered output block
    w = w_ref[...]                                         # resident (C,16): 2 vregs

    def body(i, carry):
        acc = jnp.dot(w, p_ref[i], preferred_element_type=jnp.float32)
        o_ref[i] = jnp.maximum(acc, 0.0)                   # bias already in the matmul
        return carry

    lax.fori_loop(0, p_ref.shape[0], body, 0, unroll=True)


def _pick_batch_tile(n, max_tile=16):
    """Largest divisor of n (<= max_tile) that still leaves a grid of >= 2 steps (v7x dual-TC)."""
    best = 1
    for cand in range(2, min(max_tile, n) + 1):
        if n % cand == 0 and n // cand >= 2:
            best = cand
    return best


def glimpse_forward(x, conv_w, bn_gamma, bn_beta, eps=1e-5):
    """x: (N, 1, H, W) float32 NCHW.  conv_w: (C_out, 1, 3, 3).  Returns (N, C_out*(H-2)*(W-2))."""
    N, C_in, H, W = x.shape
    assert C_in == 1
    C_out = conv_w.shape[0]
    Ho, Wo = H - 2, W - 2
    HoWo = Ho * Wo
    M = N * HoWo

    # --- im2col in transposed (N, K, Ho*Wo) layout; k = dh*3 + dw matches conv_w.reshape(C, 9)
    xs = x[:, 0]                                                      # (N, H, W)
    cols = [xs[:, dh:dh + Ho, dw:dw + Wo] for dh in range(3) for dw in range(3)]
    pt9 = jnp.stack(cols, axis=1).reshape(N, _K, HoWo)                # (N, 9, Ho*Wo)

    w9 = conv_w.reshape(C_out, _K).astype(jnp.float32)                # (C, 9)

    # --- fold training-mode BatchNorm (biased variance over all N*Ho*Wo positions) into a
    #     per-channel affine via the centered 9x9 tap covariance (real taps only, no bias row).
    p_mean = jnp.mean(pt9, axis=(0, 2))                               # (9,)
    pc = pt9 - p_mean[None, :, None]
    cov = jnp.einsum("nkm,nlm->kl", pc, pc) / M                       # (9, 9)
    mean_c = w9 @ p_mean                                              # (C,)
    var_c = jnp.maximum(jnp.einsum("ck,kl,cl->c", w9, cov, w9), 0.0)  # clamp tiny negatives
    scale = bn_gamma.astype(jnp.float32) * lax.rsqrt(var_c + eps)     # (C,)
    shift = bn_beta.astype(jnp.float32) - mean_c * scale              # (C,)

    # --- fold scale into weights, shift into column 9; append the constant-1 patch row.
    w_s = jnp.concatenate(
        [w9 * scale[:, None], shift[:, None],
         jnp.zeros((C_out, _K_PAD - _K - 1), jnp.float32)], axis=1)                 # (C, 16)
    pt = jnp.concatenate(
        [pt9, jnp.ones((N, 1, HoWo), jnp.float32),
         jnp.zeros((N, _K_PAD - _K - 1, HoWo), jnp.float32)], axis=1)               # (N, 16, Ho*Wo)

    b_tile = _pick_batch_tile(N)
    grid = (N // b_tile,)

    grid_spec = pltpu.PrefetchScalarGridSpec(
        num_scalar_prefetch=0,
        grid=grid,
        in_specs=[
            pl.BlockSpec((C_out, _K_PAD), lambda n: (0, 0)),           # resident weights
            pl.BlockSpec((b_tile, _K_PAD, HoWo), lambda n: (n, 0, 0)),
        ],
        out_specs=pl.BlockSpec((b_tile, C_out, HoWo), lambda n: (n, 0, 0)),
    )
    out = pl.pallas_call(
        _glimpse_kernel,
        out_shape=jax.ShapeDtypeStruct((N, C_out, HoWo), jnp.float32),
        grid_spec=grid_spec,
        compiler_params=pltpu.CompilerParams(
            dimension_semantics=("parallel",),           # no cross-image dependence
            vmem_limit_bytes=32 * 1024 * 1024,           # safe on v5e (16 MiB default) .. v7x
        ),
    )(w_s, pt)

    # Output is already (N, C, Ho*Wo) in NCHW order: PyTorch's x.view(N, -1) is a free reshape.
    return out.reshape(N, C_out * HoWo)


def _reference_forward(x, conv_w, bn_gamma, bn_beta, eps=1e-5):
    conv = jax.lax.conv_general_dilated(
        x, conv_w, window_strides=(1, 1), padding="VALID",
        dimension_numbers=("NCHW", "OIHW", "NCHW"))
    mean = jnp.mean(conv, axis=(0, 2, 3), keepdims=True)
    var = jnp.mean(jnp.square(conv - mean), axis=(0, 2, 3), keepdims=True)
    y = (conv - mean) * jax.lax.rsqrt(var + eps)
    y = y * bn_gamma.reshape(1, -1, 1, 1) + bn_beta.reshape(1, -1, 1, 1)
    y = jnp.maximum(y, 0.0)
    return y.reshape(x.shape[0], -1)


if __name__ == "__main__":
    key = jax.random.PRNGKey(0)
    k_x, k_w = jax.random.split(key)

    N, H, W = 2, 16, 16
    C_out = 128

    x = jax.random.normal(k_x, (N, 1, H, W), dtype=jnp.float32)

    # xavier_uniform_ for Conv2d(1, 128, 3): fan_in = 9, fan_out = 128*9
    bound = (6.0 / (9 + C_out * 9)) ** 0.5
    conv_w = jax.random.uniform(k_w, (C_out, 1, 3, 3), dtype=jnp.float32,
                                minval=-bound, maxval=bound)
    bn_gamma = jnp.ones((C_out,), jnp.float32)   # PyTorch BatchNorm2d default init
    bn_beta = jnp.zeros((C_out,), jnp.float32)

    out = glimpse_forward(x, conv_w, bn_gamma, bn_beta)
    out = jax.block_until_ready(out)

    ref = _reference_forward(x, conv_w, bn_gamma, bn_beta)
    assert out.shape == (N, C_out * (H - 2) * (W - 2)), out.shape
    err = float(jnp.max(jnp.abs(out - ref)))
    assert jnp.allclose(out, ref, atol=1e-4, rtol=1e-4), err

    print("KERNEL_OK")
</pallas_src>

<mosaic_0001>
module attributes {stable_mosaic.version = 11 : i64} {
  func.func @_glimpse_kernel(%arg0: i32, %arg1: memref<128x16xf32, #tpu.memory_space<vmem>>, %arg2: memref<1x16x196xf32, #tpu.memory_space<vmem>>, %arg3: memref<1x128x196xf32, #tpu.memory_space<vmem>>) attributes {dimension_semantics = [#tpu.dimension_semantics<parallel>], iteration_bounds = array<i64: 2>, scalar_prefetch = 0 : i64, scratch_operands = 0 : i64, tpu.core_type = #tpu.core_type<tc>, window_params = [{pipeline_mode = #tpu.pipeline_mode<synchronous>, transform_indices = @transform_0, window_bounds = array<i64: 128, 16>}, {transform_indices = @transform_1, window_bounds = array<i64: 1, 16, 196>}, {transform_indices = @transform_2, window_bounds = array<i64: 1, 128, 196>}]} {
    %c0 = arith.constant 0 : index
    %c0_0 = arith.constant 0 : index
    %0 = vector.load %arg1[%c0, %c0_0] : memref<128x16xf32, #tpu.memory_space<vmem>>, vector<128x16xf32>
    %c0_i32 = arith.constant 0 : i32
    %1 = arith.index_cast %c0_i32 : i32 to index
    %c0_1 = arith.constant 0 : index
    %c0_2 = arith.constant 0 : index
    %2 = vector.load %arg2[%1, %c0_1, %c0_2] : memref<1x16x196xf32, #tpu.memory_space<vmem>>, vector<1x16x196xf32>
    %3 = vector.shape_cast %2 : vector<1x16x196xf32> to vector<16x196xf32>
    %cst = arith.constant dense<0.000000e+00> : vector<128x196xf32>
    %4 = tpu.matmul %0, %3, %cst {dimension_numbers = #tpu.dot_dimension_numbers<[1], [0], [0], [1], [0, 0, 1, 1], [], []>} : vector<128x16xf32>, vector<16x196xf32>, vector<128x196xf32> -> vector<128x196xf32>
    %cst_3 = arith.constant 0.000000e+00 : f32
    %5 = vector.broadcast %cst_3 : f32 to vector<128x196xf32>
    %6 = arith.maximumf %4, %5 : vector<128x196xf32>
    %7 = arith.index_cast %c0_i32 : i32 to index
    %c0_4 = arith.constant 0 : index
    %c0_5 = arith.constant 0 : index
    %8 = vector.load %arg3[%7, %c0_4, %c0_5] : memref<1x128x196xf32, #tpu.memory_space<vmem>>, vector<1x128x196xf32>
    %9 = vector.shape_cast %8 : vector<1x128x196xf32> to vector<128x196xf32>
    %10 = vector.shape_cast %6 : vector<128x196xf32> to vector<1x128x196xf32>
    tpu.vector_store %arg3[%7, %c0_4, %c0_5], %10 {strides = array<i32>} : memref<1x128x196xf32, #tpu.memory_space<vmem>>, vector<1x128x196xf32>,
    %c1_i32 = arith.constant 1 : i32
    return
  }
  func.func @transform_0(%arg0: i32) -> (i32, i32) {
    %c0_i32 = arith.constant 0 : i32
    %c0_i32_0 = arith.constant 0 : i32
    %c0_i32_1 = arith.constant 0 : i32
    return %c0_i32, %c0_i32_0 : i32, i32
  }
  func.func @transform_1(%arg0: i32) -> (i32, i32, i32) {
    %c0_i32 = arith.constant 0 : i32
    %c0_i32_0 = arith.constant 0 : i32
    %c0_i32_1 = arith.constant 0 : i32
    return %arg0, %c0_i32, %c0_i32_0 : i32, i32, i32
  }
  func.func @transform_2(%arg0: i32) -> (i32, i32, i32) {
    %c0_i32 = arith.constant 0 : i32
    %c0_i32_0 = arith.constant 0 : i32
    %c0_i32_1 = arith.constant 0 : i32
    return %arg0, %c0_i32, %c0_i32_0 : i32, i32, i32
  }
}

</mosaic_0001>

<llo_original>
// kernel: tpu_custom_call.1
$region0: #{tpu_custom_call.1}
  #allocation0 [shape = 'u32[]', space=smem, size = 0x4, offset = 0x4, fixed_abs, tag = 'smem constant byte address 0x4 - core index']
  #allocation1 [shape = 'u32[72,128]{1,0:T(1,128)}', space=vmem, size = 0x9000, scoped, tag = 'internal scratch']
  %s0 = inlined_call_operand.vmem [shape: f32[128,16], index: 0, kind: input, shape index: {}]
  %s1 = inlined_call_operand.vmem [shape: f32[2,16,196], index: 1, kind: input, shape index: {}]
  %s2 = inlined_call_operand.vmem [shape: f32[2,128,196], index: 2, kind: output, shape index: {}]
  %s3 = sld [smem:[#allocation0]]
  $region41: #{tpu_custom_call.1} parent=0
    _
  %s5 = ssub.s32 1, %s3
  %s6 = scalar_select 0, %s5, %s3
  loop: start=0, step=1, limit=4
  $region2: #{tpu_custom_call.1} parent=0 // loop_pre_header
    _
  $region3: #{tpu_custom_call.1} parent=0 // loop_header
    %s8 = sphi 0, %s12
    %p9 = scmp.ge.s32.totalorder %s8, 4
    %s16 = sphi 0, %s16
    %s18 = sphi 0, %s16
    %s19 = sphi 0, %s18
    %s33 = sphi 0, %s19
    %s39 = sphi 0, %s41
    %s42 = sphi 0, %s39
    %s43 = sphi 0, %s42
    %s59 = sphi 0, %s43
    %s65 = sphi 0, %s67
    %s68 = sphi 0, %s65
    %s69 = sphi 0, %s68
    %s85 = sphi 0, %s69
  $region4: #{tpu_custom_call.1} parent=0 // loop_header_branch
    %11 = sbr.rel (%p9) target = $region8
  $region5: #{tpu_custom_call.1} parent=0 // loop_body
    %s13 = ssub.s32 %s8, 1
    %s14 = ssub.s32 %s8, 2
    %s15 = sadd.s32 %s8, 1
    %s17 = sadd.s32 %s16, 1
    %p20 = scmp.eq.s32.totalorder %s8, 1
    %p21 = scmp.ne.s32.totalorder %s16, %s18
    %p22 = scmp.eq.s32.totalorder %s8, 0
    %p23 = por %p21, %p22
    %p24 = scmp.ne.s32.totalorder %s16, %s18
    %p25 = scmp.eq.s32.totalorder %s13, 1
    %p26 = por %p24, %p25
    %p27 = scmp.ne.s32.totalorder %s18, %s19
    %p28 = scmp.eq.s32.totalorder %s13, 0
    %p29 = por %p27, %p28
    %p30 = scmp.ne.s32.totalorder %s18, %s19
    %p31 = scmp.eq.s32.totalorder %s14, 1
    %p32 = por %p30, %p31
    %p34 = scmp.ne.s32.totalorder %s19, %s33
    %p35 = scmp.eq.s32.totalorder %s14, 0
    %p36 = por %p34, %p35
    %s37 = ssub.s32 %s8, %s15
    %p38 = scmp.eq.s32.totalorder %s37, 0
    %s40 = sadd.s32 %s39, 1
    %s41 = scalar_select %p38, %s39, %s40
    %p44 = pneg %p38
    %p45 = scmp.eq.s32.totalorder %s8, 1
    %p46 = por %p44, %p45
    %p47 = scmp.ne.s32.totalorder %s39, %s42
    %p48 = scmp.eq.s32.totalorder %s8, 0
    %p49 = por %p47, %p48
    %p50 = scmp.ne.s32.totalorder %s39, %s42
    %p51 = scmp.eq.s32.totalorder %s13, 1
    %p52 = por %p50, %p51
    %p53 = scmp.ne.s32.totalorder %s42, %s43
    %p54 = scmp.eq.s32.totalorder %s13, 0
    %p55 = por %p53, %p54
    %p56 = scmp.ne.s32.totalorder %s42, %s43
    %p57 = scmp.eq.s32.totalorder %s14, 1
    %p58 = por %p56, %p57
    %p60 = scmp.ne.s32.totalorder %s43, %s59
    %p61 = scmp.eq.s32.totalorder %s14, 0
    %p62 = por %p60, %p61
    %s63 = ssub.s32 %s8, %s15
    %p64 = scmp.eq.s32.totalorder %s63, 0
    %s66 = sadd.s32 %s65, 1
    %s67 = scalar_select %p64, %s65, %s66
    %p70 = pneg %p64
    %p71 = scmp.eq.s32.totalorder %s8, 1
    %p72 = por %p70, %p71
    %p73 = scmp.ne.s32.totalorder %s65, %s68
    %p74 = scmp.eq.s32.totalorder %s8, 0
    %p75 = por %p73, %p74
    %p76 = scmp.ne.s32.totalorder %s65, %s68
    %p77 = scmp.eq.s32.totalorder %s13, 1
    %p78 = por %p76, %p77
    %p79 = scmp.ne.s32.totalorder %s68, %s69
    %p80 = scmp.eq.s32.totalorder %s13, 0
    %p81 = por %p79, %p80
    %p82 = scmp.ne.s32.totalorder %s68, %s69
    %p83 = scmp.eq.s32.totalorder %s14, 1
    %p84 = por %p82, %p83
    %p86 = scmp.ne.s32.totalorder %s69, %s85
    %p87 = scmp.eq.s32.totalorder %s14, 0
    %p88 = por %p86, %p87
    %p89 = scmp.le.s32.totalorder 1, %s8
    %p90 = scmp.lt.s32.totalorder %s8, 3
    %p91 = pnand %p89, %p90
    %p92 = pneg %p91
    // Predicated region
    $region9: #{tpu_custom_call.1} parent=5 // pred_check
      _
    $region10: #{tpu_custom_call.1} parent=5 // pred_check_branch
      %94 = sbr.rel (%p91) target = $region12
    $region11: #{tpu_custom_call.1} parent=5 // pred_region
      %s95 = ssub.s32 %s8, 1
      // Predicated region
      $region13: #{tpu_custom_call.1} parent=11 // pred_check
        %p96 = pneg %p29
      $region14: #{tpu_custom_call.1} parent=11 // pred_check_branch
        %98 = sbr.rel (%p96) target = $region16
      $region15: #{tpu_custom_call.1} parent=11 // pred_region
        _
      $region16: #{tpu_custom_call.1} parent=11 // pred_fallthru
        _
    $region12: #{tpu_custom_call.1} parent=5 // pred_fallthru
      _
    %p99 = scmp.lt.s32.totalorder %s8, 2
    // Predicated region
    $region17: #{tpu_custom_call.1} parent=5 // pred_check
      %p100 = pneg %p99
    $region18: #{tpu_custom_call.1} parent=5 // pred_check_branch
      %102 = sbr.rel (%p100) target = $region20
    $region19: #{tpu_custom_call.1} parent=5 // pred_region
      // Predicated region
      $region21: #{tpu_custom_call.1} parent=19 // pred_check
        %p103 = pneg %p49
      $region22: #{tpu_custom_call.1} parent=19 // pred_check_branch
        %105 = sbr.rel (%p103) target = $region24
      $region23: #{tpu_custom_call.1} parent=19 // pred_region
        %p106 = scmp.lt.s32.totalorder %s8, 1
        %s107 = scalar_select %p106, %s8, 1
        %s108 = smul.addr %s107, 4
        %s109 = smul.addr %s108, 8
        %s110 = scalar_lea.vmem %s1, %s109
      $region24: #{tpu_custom_call.1} parent=19 // pred_fallthru
        _
    $region20: #{tpu_custom_call.1} parent=5 // pred_fallthru
      _
    %p111 = scmp.le.s32.totalorder 1, %s8
    %p112 = scmp.lt.s32.totalorder %s8, 3
    %p113 = pnand %p111, %p112
    %p114 = pneg %p113
    // Predicated region
    $region25: #{tpu_custom_call.1} parent=5 // pred_check
      _
    $region26: #{tpu_custom_call.1} parent=5 // pred_check_branch
      %116 = sbr.rel (%p113) target = $region28
    $region27: #{tpu_custom_call.1} parent=5 // pred_region
      %s117 = ssub.s32 %s8, 1
      %p118 = pneg %p29
      %p119 = pneg %p26
      %p120 = scmp.lt.s32.totalorder %s13, 1
      %s121 = scalar_select %p120, %s13, 1
      %s122 = smul.addr %s121, 4
      %s123 = smul.addr %s122, 8
      %s124 = scalar_lea.vmem %s1, %s123
      %p125 = pneg %p55
      %p126 = pneg %p52
      %p127 = pneg %p81
      %p128 = pneg %p78
      %p129 = scmp.lt.s32.totalorder %s13, 1
      %s130 = scalar_select %p129, %s13, 1
      %s131 = smul.addr %s130, 32
      %s132 = smul.addr %s131, 8
      %s133 = scalar_lea.vmem %s2, %s132
      %p134 = scmp.lt.s32.totalorder %s13, 1
      %s135 = scalar_select %p134, %s13, 1
      %s136 = smul.addr %s135, 4
      %s137 = smul.addr %s136, 8
      %s138 = scalar_lea.vmem %s1, %s137
      %p139 = scmp.lt.s32.totalorder %s13, 1
      %s140 = scalar_select %p139, %s13, 1
      %s141 = smul.addr %s140, 32
      %s142 = smul.addr %s141, 8
      %s143 = scalar_lea.vmem %s2, %s142
      %v144 = vld [vmem:[%s0] sm:$0xff]
      %v145 = vld [vmem:[%s0 + $0x8] sm:$0xff]
      %v146 = vld [vmem:[%s0 + $0x10] sm:$0xff]
      %v147 = vld [vmem:[%s0 + $0x18] sm:$0xff]
      %v148 = vld [vmem:[%s0 + $0x20] sm:$0xff]
      %v149 = vld [vmem:[%s0 + $0x28] sm:$0xff]
      %v150 = vld [vmem:[%s0 + $0x30] sm:$0xff]
      %v151 = vld [vmem:[%s0 + $0x38] sm:$0xff]
      %v152 = vld [vmem:[%s0 + $0x40] sm:$0xff]
      %v153 = vld [vmem:[%s0 + $0x48] sm:$0xff]
      %v154 = vld [vmem:[%s0 + $0x50] sm:$0xff]
      %v155 = vld [vmem:[%s0 + $0x58] sm:$0xff]
      %v156 = vld [vmem:[%s0 + $0x60] sm:$0xff]
      %v157 = vld [vmem:[%s0 + $0x68] sm:$0xff]
      %v158 = vld [vmem:[%s0 + $0x70] sm:$0xff]
      %v159 = vld [vmem:[%s0 + $0x78] sm:$0xff]
      %v160 = vld [vmem:[%s138] sm:$0xff]
      %v161 = vld [vmem:[%s138 + $0x8] sm:$0xff]
      %v162 = vld [vmem:[%s138 + $0x10] sm:$0xff]
      %v163 = vld [vmem:[%s138 + $0x18] sm:$0xff]
      %vm164 = vcmask 130048
      %v166 = vsel %vm164, %v144, 0
      %v169 = vsel %vm164, %v145, 0
      %v172 = vsel %vm164, %v146, 0
      %v175 = vsel %vm164, %v147, 0
      %v178 = vsel %vm164, %v148, 0
      %v181 = vsel %vm164, %v149, 0
      %v184 = vsel %vm164, %v150, 0
      %v187 = vsel %vm164, %v151, 0
      %v190 = vsel %vm164, %v152, 0
      %v193 = vsel %vm164, %v153, 0
      %v196 = vsel %vm164, %v154, 0
      %v199 = vsel %vm164, %v155, 0
      %v202 = vsel %vm164, %v156, 0
      %v205 = vsel %vm164, %v157, 0
      %v208 = vsel %vm164, %v158, 0
      %v211 = vsel %vm164, %v159, 0
      %213 = vmatpush.msra.mxu0 0.0
      %214 = vmatpush.msra.mxu0 0.0
      %215 = vmatpush.msra.mxu0 0.0
      %216 = vmatpush.msra.mxu0 0.0
      %217 = vmatpush.msra.mxu0 0.0
      %218 = vmatpush.msra.mxu0 0.0
      %219 = vmatpush.msra.mxu0 0.0
      %220 = vmatpush.msra.mxu0 0.0
      %221 = vmatpush.msra.mxu0 0.0
      %222 = vmatpush.msra.mxu0 0.0
      %223 = vmatpush.msra.mxu0 0.0
      %224 = vmatpush.msra.mxu0 0.0
      %225 = vmatpush.msra.mxu0 0.0
      %226 = vmatpush.msra.mxu0 0.0
      %227 = vmatpush.msra.mxu0 %v162
      %228 = vmatpush.msra.mxu0 %v160
      %229 = vmatmul.f32.gmra.mxu0 %v166
      %v230 = vpop.f32.mrf.mxu0
      %v231 = vadd.f32 0.0, %v230
      %232 = vmatmul.f32.gmra.mxu0 %v169
      %v233 = vpop.f32.mrf.mxu0
      %v234 = vadd.f32 0.0, %v233
      %235 = vmatmul.f32.gmra.mxu0 %v172
      %v236 = vpop.f32.mrf.mxu0
      %v237 = vadd.f32 0.0, %v236
      %238 = vmatmul.f32.gmra.mxu0 %v175
      %v239 = vpop.f32.mrf.mxu0
      %v240 = vadd.f32 0.0, %v239
      %241 = vmatmul.f32.gmra.mxu0 %v178
      %v242 = vpop.f32.mrf.mxu0
      %v243 = vadd.f32 0.0, %v242
      %244 = vmatmul.f32.gmra.mxu0 %v181
      %v245 = vpop.f32.mrf.mxu0
      %v246 = vadd.f32 0.0, %v245
      %247 = vmatmul.f32.gmra.mxu0 %v184
      %v248 = vpop.f32.mrf.mxu0
      %v249 = vadd.f32 0.0, %v248
      %250 = vmatmul.f32.gmra.mxu0 %v187
      %v251 = vpop.f32.mrf.mxu0
      %v252 = vadd.f32 0.0, %v251
      %253 = vmatmul.f32.gmra.mxu0 %v190
      %v254 = vpop.f32.mrf.mxu0
      %v255 = vadd.f32 0.0, %v254
      %256 = vmatmul.f32.gmra.mxu0 %v193
      %v257 = vpop.f32.mrf.mxu0
      %v258 = vadd.f32 0.0, %v257
      %259 = vmatmul.f32.gmra.mxu0 %v196
      %v260 = vpop.f32.mrf.mxu0
      %v261 = vadd.f32 0.0, %v260
      %262 = vmatmul.f32.gmra.mxu0 %v199
      %v263 = vpop.f32.mrf.mxu0
      %v264 = vadd.f32 0.0, %v263
      %265 = vmatmul.f32.gmra.mxu0 %v202
      %v266 = vpop.f32.mrf.mxu0
      %v267 = vadd.f32 0.0, %v266
      %268 = vmatmul.f32.gmra.mxu0 %v205
      %v269 = vpop.f32.mrf.mxu0
      %v270 = vadd.f32 0.0, %v269
      %271 = vmatmul.f32.gmra.mxu0 %v208
      %v272 = vpop.f32.mrf.mxu0
      %v273 = vadd.f32 0.0, %v272
      %274 = vmatmul.f32.gmra.mxu0 %v211
      %v275 = vpop.f32.mrf.mxu0
      %v276 = vadd.f32 0.0, %v275
      %277 = vdwg.mxu0
      %278 = vmatpush.msra.mxu0 0.0
      %279 = vmatpush.msra.mxu0 0.0
      %280 = vmatpush.msra.mxu0 0.0
      %281 = vmatpush.msra.mxu0 0.0
      %282 = vmatpush.msra.mxu0 0.0
      %283 = vmatpush.msra.mxu0 0.0
      %284 = vmatpush.msra.mxu0 0.0
      %285 = vmatpush.msra.mxu0 0.0
      %286 = vmatpush.msra.mxu0 0.0
      %287 = vmatpush.msra.mxu0 0.0
      %288 = vmatpush.msra.mxu0 0.0
      %289 = vmatpush.msra.mxu0 0.0
      %290 = vmatpush.msra.mxu0 0.0
      %291 = vmatpush.msra.mxu0 0.0
      %292 = vmatpush.msra.mxu0 %v163
      %293 = vmatpush.msra.mxu0 %v161
      %294 = vmatmul.f32.gmra.mxu0 %v166
      %v295 = vpop.f32.mrf.mxu0
      %v296 = vadd.f32 0.0, %v295
      %297 = vmatmul.f32.gmra.mxu0 %v169
      %v298 = vpop.f32.mrf.mxu0
      %v299 = vadd.f32 0.0, %v298
      %300 = vmatmul.f32.gmra.mxu0 %v172
      %v301 = vpop.f32.mrf.mxu0
      %v302 = vadd.f32 0.0, %v301
      %303 = vmatmul.f32.gmra.mxu0 %v175
      %v304 = vpop.f32.mrf.mxu0
      %v305 = vadd.f32 0.0, %v304
      %306 = vmatmul.f32.gmra.mxu0 %v178
      %v307 = vpop.f32.mrf.mxu0
      %v308 = vadd.f32 0.0, %v307
      %309 = vmatmul.f32.gmra.mxu0 %v181
      %v310 = vpop.f32.mrf.mxu0
      %v311 = vadd.f32 0.0, %v310
      %312 = vmatmul.f32.gmra.mxu0 %v184
      %v313 = vpop.f32.mrf.mxu0
      %v314 = vadd.f32 0.0, %v313
      %315 = vmatmul.f32.gmra.mxu0 %v187
      %v316 = vpop.f32.mrf.mxu0
      %v317 = vadd.f32 0.0, %v316
      %318 = vmatmul.f32.gmra.mxu0 %v190
      %v319 = vpop.f32.mrf.mxu0
      %v320 = vadd.f32 0.0, %v319
      %321 = vmatmul.f32.gmra.mxu0 %v193
      %v322 = vpop.f32.mrf.mxu0
      %v323 = vadd.f32 0.0, %v322
      %324 = vmatmul.f32.gmra.mxu0 %v196
      %v325 = vpop.f32.mrf.mxu0
      %v326 = vadd.f32 0.0, %v325
      %327 = vmatmul.f32.gmra.mxu0 %v199
      %v328 = vpop.f32.mrf.mxu0
      %v329 = vadd.f32 0.0, %v328
      %330 = vmatmul.f32.gmra.mxu0 %v202
      %v331 = vpop.f32.mrf.mxu0
      %v332 = vadd.f32 0.0, %v331
      %333 = vmatmul.f32.gmra.mxu0 %v205
      %v334 = vpop.f32.mrf.mxu0
      %v335 = vadd.f32 0.0, %v334
      %336 = vmatmul.f32.gmra.mxu0 %v208
      %v337 = vpop.f32.mrf.mxu0
      %v338 = vadd.f32 0.0, %v337
      %339 = vmatmul.f32.gmra.mxu0 %v211
      %v340 = vpop.f32.mrf.mxu0
      %v341 = vadd.f32 0.0, %v340
      %342 = vdwg.mxu0
      %v343 = vmax.f32 %v231, 0.0
      %v344 = vmax.f32 %v296, 0.0
      %v345 = vmax.f32 %v234, 0.0
      %v346 = vmax.f32 %v299, 0.0
      %v347 = vmax.f32 %v237, 0.0
      %v348 = vmax.f32 %v302, 0.0
      %v349 = vmax.f32 %v240, 0.0
      %v350 = vmax.f32 %v305, 0.0
      %v351 = vmax.f32 %v243, 0.0
      %v352 = vmax.f32 %v308, 0.0
      %v353 = vmax.f32 %v246, 0.0
      %v354 = vmax.f32 %v311, 0.0
      %v355 = vmax.f32 %v249, 0.0
      %v356 = vmax.f32 %v314, 0.0
      %v357 = vmax.f32 %v252, 0.0
      %v358 = vmax.f32 %v317, 0.0
      %v359 = vmax.f32 %v255, 0.0
      %v360 = vmax.f32 %v320, 0.0
      %v361 = vmax.f32 %v258, 0.0
      %v362 = vmax.f32 %v323, 0.0
      %v363 = vmax.f32 %v261, 0.0
      %v364 = vmax.f32 %v326, 0.0
      %v365 = vmax.f32 %v264, 0.0
      %v366 = vmax.f32 %v329, 0.0
      %v367 = vmax.f32 %v267, 0.0
      %v368 = vmax.f32 %v332, 0.0
      %v369 = vmax.f32 %v270, 0.0
      %v370 = vmax.f32 %v335, 0.0
      %v371 = vmax.f32 %v273, 0.0
      %v372 = vmax.f32 %v338, 0.0
      %v373 = vmax.f32 %v276, 0.0
      %v374 = vmax.f32 %v341, 0.0
      %375 = vst [vmem:[%s143] sm:$0xff] %v343
      %vm376 = vcmask 556032
      %377 = vst.msk [vmem:[%s143 + $0x8] sm:$0xff] %vm376, %v344
      %378 = vst [vmem:[%s143 + $0x10] sm:$0xff] %v345
      %379 = vst.msk [vmem:[%s143 + $0x18] sm:$0xff] %vm376, %v346
      %380 = vst [vmem:[%s143 + $0x20] sm:$0xff] %v347
      %381 = vst.msk [vmem:[%s143 + $0x28] sm:$0xff] %vm376, %v348
      %382 = vst [vmem:[%s143 + $0x30] sm:$0xff] %v349
      %383 = vst.msk [vmem:[%s143 + $0x38] sm:$0xff] %vm376, %v350
      %384 = vst [vmem:[%s143 + $0x40] sm:$0xff] %v351
      %385 = vst.msk [vmem:[%s143 + $0x48] sm:$0xff] %vm376, %v352
      %386 = vst [vmem:[%s143 + $0x50] sm:$0xff] %v353
      %387 = vst.msk [vmem:[%s143 + $0x58] sm:$0xff] %vm376, %v354
      %388 = vst [vmem:[%s143 + $0x60] sm:$0xff] %v355
      %389 = vst.msk [vmem:[%s143 + $0x68] sm:$0xff] %vm376, %v356
      %390 = vst [vmem:[%s143 + $0x70] sm:$0xff] %v357
      %391 = vst.msk [vmem:[%s143 + $0x78] sm:$0xff] %vm376, %v358
      %392 = vst [vmem:[%s143 + $0x80] sm:$0xff] %v359
      %393 = vst.msk [vmem:[%s143 + $0x88] sm:$0xff] %vm376, %v360
      %394 = vst [vmem:[%s143 + $0x90] sm:$0xff] %v361
      %395 = vst.msk [vmem:[%s143 + $0x98] sm:$0xff] %vm376, %v362
      %396 = vst [vmem:[%s143 + $0xa0] sm:$0xff] %v363
      %397 = vst.msk [vmem:[%s143 + $0xa8] sm:$0xff] %vm376, %v364
      %398 = vst [vmem:[%s143 + $0xb0] sm:$0xff] %v365
      %399 = vst.msk [vmem:[%s143 + $0xb8] sm:$0xff] %vm376, %v366
      %400 = vst [vmem:[%s143 + $0xc0] sm:$0xff] %v367
      %401 = vst.msk [vmem:[%s143 + $0xc8] sm:$0xff] %vm376, %v368
      %402 = vst [vmem:[%s143 + $0xd0] sm:$0xff] %v369
      %403 = vst.msk [vmem:[%s143 + $0xd8] sm:$0xff] %vm376, %v370
      %404 = vst [vmem:[%s143 + $0xe0] sm:$0xff] %v371
      %405 = vst.msk [vmem:[%s143 + $0xe8] sm:$0xff] %vm376, %v372
      %406 = vst [vmem:[%s143 + $0xf0] sm:$0xff] %v373
      %407 = vst.msk [vmem:[%s143 + $0xf8] sm:$0xff] %vm376, %v374
      %p408 = scmp.lt.s32.totalorder %s13, 1
      %s409 = scalar_select %p408, %s13, 1
      %s410 = smul.addr %s409, 32
      %s411 = smul.addr %s410, 8
      %s412 = scalar_lea.vmem %s2, %s411
      // Predicated region
      $region29: #{tpu_custom_call.1} parent=27 // pred_check
        %p413 = pneg %p78
      $region30: #{tpu_custom_call.1} parent=27 // pred_check_branch
        %415 = sbr.rel (%p413) target = $region32
      $region31: #{tpu_custom_call.1} parent=27 // pred_region
        _
      $region32: #{tpu_custom_call.1} parent=27 // pred_fallthru
        _
    $region28: #{tpu_custom_call.1} parent=5 // pred_fallthru
      _
    %p416 = scmp.le.s32.totalorder 2, %s8
    // Predicated region
    $region33: #{tpu_custom_call.1} parent=5 // pred_check
      %p417 = pneg %p416
    $region34: #{tpu_custom_call.1} parent=5 // pred_check_branch
      %419 = sbr.rel (%p417) target = $region36
    $region35: #{tpu_custom_call.1} parent=5 // pred_region
      %s420 = ssub.s32 %s8, 2
      // Predicated region
      $region37: #{tpu_custom_call.1} parent=35 // pred_check
        %p421 = pneg %p84
      $region38: #{tpu_custom_call.1} parent=35 // pred_check_branch
        %423 = sbr.rel (%p421) target = $region40
      $region39: #{tpu_custom_call.1} parent=35 // pred_region
        %p424 = scmp.lt.s32.totalorder %s14, 1
        %s425 = scalar_select %p424, %s14, 1
        %s426 = smul.addr %s425, 32
        %s427 = smul.addr %s426, 8
        %s428 = scalar_lea.vmem %s2, %s427
      $region40: #{tpu_custom_call.1} parent=35 // pred_fallthru
        _
    $region36: #{tpu_custom_call.1} parent=5 // pred_fallthru
      _
  $region6: #{tpu_custom_call.1} parent=0 // loop_footer
    %s12 = sadd.s32 1, %s8
  $region7: #{tpu_custom_call.1} parent=0 // loop_footer_branch
    %7 = sbr.rel target = $region3
  $region8: #{tpu_custom_call.1} parent=0 // loop_exit
    _

</llo_original>
